<compile_context>
chip_gen: v7x
topology: tpu7x:2x2x1
jax: 0.10.0
libtpu: 0.0.40
codegen_flags: <defaults>
</compile_context>

<pallas_src>
import jax
import jax.numpy as jnp
import numpy as np
from jax import lax
from jax.experimental import pallas as pl
from jax.experimental.pallas import tpu as pltpu


# ----------------------------------------------------------------------------
# Kernel 1: timestep embedding  emb = SiLU(t) @ W + b   (one batched matmul)
# ----------------------------------------------------------------------------
def emb_kernel(t_ref, w_ref, b_ref, emb_ref):
    t = t_ref[...].astype(jnp.float32)                      # (B, D)
    silu_t = t * jax.nn.sigmoid(t)                          # SiLU on VPU/EUP
    emb = jnp.dot(silu_t, w_ref[...].astype(jnp.float32),
                  preferred_element_type=jnp.float32)
    emb_ref[...] = emb + b_ref[...].astype(jnp.float32)     # (B, 6D) f32


# ----------------------------------------------------------------------------
# Kernel 2: LayerNorm(eps=1e-6, no affine) + (scale_msa, shift_msa) modulation
#   grid = (B, S // TS); emb block is (1, 6, D) so rows 0/1 are shift/scale.
# ----------------------------------------------------------------------------
def ln_mod_kernel(x_ref, emb_ref, o_ref):
    x = x_ref[0].astype(jnp.float32)                        # (TS, D)
    e = emb_ref[0]                                          # (6, D) f32
    shift_msa = e[0:1, :]                                   # (1, D)
    scale_p1 = 1.0 + e[1:2, :]                              # (1, D)

    mean = jnp.mean(x, axis=-1, keepdims=True)
    xc = x - mean
    var = jnp.mean(xc * xc, axis=-1, keepdims=True)
    ln = xc * lax.rsqrt(var + 1e-6)

    o_ref[0] = (ln * scale_p1 + shift_msa).astype(o_ref.dtype)


def _pick_block_s(S, D, itemsize):
    """Largest sublane-aligned divisor of S whose block stays within a VMEM budget."""
    budget = 4 * 1024 * 1024        # per-block bytes; leaves room for double-buffering
    row_bytes = D * max(int(itemsize), 4)   # f32 compute copy dominates
    for cand in (2048, 1024, 512, 256, 128, 64, 32, 16, 8):
        if cand <= S and S % cand == 0 and cand * row_bytes <= budget:
            return cand
    return S                        # small or awkward S: single tile per batch


# ----------------------------------------------------------------------------
# Wrapper: AdaLayerNorm.forward (seq_len_list=None path)
# ----------------------------------------------------------------------------
def ada_layer_norm(x, timestep, w, b, *, block_s=None):
    # TODO(synk): seq_len_list != None (ragged per-sample expand of emb) is not
    # implemented; only the emb.unsqueeze(1) broadcast path is covered.
    B, S, D = x.shape

    # 1) timestep embedding: single batched (B,D)@(D,6D) matmul.
    emb = pl.pallas_call(
        emb_kernel,
        out_shape=jax.ShapeDtypeStruct((B, 6 * D), jnp.float32),
    )(timestep, w, b)
    emb3 = emb.reshape(B, 6, D)       # contiguous reshape: free view at XLA level

    # 2) LayerNorm + modulation, tiled over (B, S-tiles) for pipelining.
    if block_s is None:
        block_s = _pick_block_s(S, D, jnp.dtype(x.dtype).itemsize)

    x_out = pl.pallas_call(
        ln_mod_kernel,
        out_shape=jax.ShapeDtypeStruct((B, S, D), x.dtype),
        grid=(B, S // block_s),
        in_specs=[pl.BlockSpec((1, block_s, D), lambda bi, si: (bi, si, 0)),
                  pl.BlockSpec((1, 6, D), lambda bi, si: (bi, 0, 0))],
        out_specs=pl.BlockSpec((1, block_s, D), lambda bi, si: (bi, si, 0)),
        compiler_params=pltpu.CompilerParams(
            dimension_semantics=("parallel", "parallel")),
    )(x, emb3)

    gate_msa = emb3[:, 2:3, :]
    shift_mlp = emb3[:, 3:4, :]
    scale_mlp = emb3[:, 4:5, :]
    gate_mlp = emb3[:, 5:6, :]
    return x_out, gate_msa, shift_mlp, scale_mlp, gate_mlp


# ----------------------------------------------------------------------------
# Pure-JAX reference (mirrors the PyTorch forward exactly)
# ----------------------------------------------------------------------------
def ada_layer_norm_ref(x, timestep, w, b):
    emb = jax.nn.silu(timestep.astype(jnp.float32)) @ w + b[0]   # (B, 6D)
    emb = emb[:, None, :]                                        # (B, 1, 6D)
    (shift_msa, scale_msa, gate_msa,
     shift_mlp, scale_mlp, gate_mlp) = jnp.split(emb, 6, axis=-1)

    xf = x.astype(jnp.float32)
    mean = xf.mean(-1, keepdims=True)
    var = ((xf - mean) ** 2).mean(-1, keepdims=True)
    ln = (xf - mean) * lax.rsqrt(var + 1e-6)
    x_out = (ln * (1.0 + scale_msa) + shift_msa).astype(x.dtype)
    return x_out, gate_msa, shift_mlp, scale_mlp, gate_mlp


if __name__ == "__main__":
    B, S, D = 2, 256, 128        # batch, sequence, embedding_dim

    key = jax.random.PRNGKey(0)
    k0, k1, k2, k3 = jax.random.split(key, 4)
    x = jax.random.normal(k0, (B, S, D), jnp.float32)
    timestep = jax.random.normal(k1, (B, D), jnp.float32)
    w = 0.02 * jax.random.normal(k2, (D, 6 * D), jnp.float32)
    b = 0.02 * jax.random.normal(k3, (1, 6 * D), jnp.float32)

    outs = ada_layer_norm(x, timestep, w, b)
    outs = jax.block_until_ready(outs)

    with jax.default_matmul_precision("highest"):
        refs = ada_layer_norm_ref(x, timestep, w, b)
    refs = jax.block_until_ready(refs)

    for o, r in zip(outs, refs):
        np.testing.assert_allclose(np.asarray(o), np.asarray(r),
                                   rtol=1e-4, atol=1e-4)
    print("KERNEL_OK")
</pallas_src>

<mosaic_0001>
module attributes {stable_mosaic.version = 11 : i64} {
  func.func @emb_kernel(%arg0: memref<2x128xf32, #tpu.memory_space<vmem>>, %arg1: memref<128x768xf32, #tpu.memory_space<vmem>>, %arg2: memref<1x768xf32, #tpu.memory_space<vmem>>, %arg3: memref<2x768xf32, #tpu.memory_space<vmem>>) attributes {dimension_semantics = [], scalar_prefetch = 0 : i64, scratch_operands = 0 : i64, tpu.core_type = #tpu.core_type<tc>} {
    %c0 = arith.constant 0 : index
    %c0_0 = arith.constant 0 : index
    %0 = vector.load %arg0[%c0, %c0_0] : memref<2x128xf32, #tpu.memory_space<vmem>>, vector<2x128xf32>
    %1 = arith.negf %0 : vector<2x128xf32>
    %2 = math.exp %1 : vector<2x128xf32>
    %cst = arith.constant 1.000000e+00 : f32
    %3 = vector.broadcast %cst : f32 to vector<2x128xf32>
    %4 = arith.addf %3, %2 : vector<2x128xf32>
    %5 = arith.divf %3, %4 : vector<2x128xf32>
    %6 = arith.mulf %0, %5 : vector<2x128xf32>
    %c0_1 = arith.constant 0 : index
    %c0_2 = arith.constant 0 : index
    %7 = vector.load %arg1[%c0_1, %c0_2] : memref<128x768xf32, #tpu.memory_space<vmem>>, vector<128x768xf32>
    %cst_3 = arith.constant dense<0.000000e+00> : vector<2x768xf32>
    %8 = tpu.matmul %6, %7, %cst_3 {dimension_numbers = #tpu.dot_dimension_numbers<[1], [0], [0], [1], [0, 0, 1, 1], [], []>} : vector<2x128xf32>, vector<128x768xf32>, vector<2x768xf32> -> vector<2x768xf32>
    %c0_4 = arith.constant 0 : index
    %c0_5 = arith.constant 0 : index
    %9 = vector.load %arg2[%c0_4, %c0_5] : memref<1x768xf32, #tpu.memory_space<vmem>>, vector<1x768xf32>
    %10 = vector.broadcast %9 : vector<1x768xf32> to vector<2x768xf32>
    %11 = arith.addf %8, %10 : vector<2x768xf32>
    %c0_6 = arith.constant 0 : index
    %c0_7 = arith.constant 0 : index
    %12 = vector.load %arg3[%c0_6, %c0_7] : memref<2x768xf32, #tpu.memory_space<vmem>>, vector<2x768xf32>
    tpu.vector_store %arg3[%c0_6, %c0_7], %11 {strides = array<i32>} : memref<2x768xf32, #tpu.memory_space<vmem>>, vector<2x768xf32>,
    return
  }
}

</mosaic_0001>

<llo_original>
// kernel: tpu_custom_call.1
$region0: #{tpu_custom_call.1}
  #allocation0 [shape = 'u32[]', space=smem, size = 0x4, offset = 0x4, fixed_abs, tag = 'smem constant byte address 0x4 - core index']
  #allocation1 [shape = 'u32[144,128]{1,0:T(1,128)}', space=vmem, size = 0x12000, scoped, tag = 'internal scratch']
  %s0 = inlined_call_operand.hbm [shape: f32[2,128], index: 0, kind: input, shape index: {}]
  %s1 = inlined_call_operand.hbm [shape: f32[128,768], index: 1, kind: input, shape index: {}]
  %s2 = inlined_call_operand.vmem [shape: f32[1,768], index: 2, kind: input, shape index: {}]
  %s3 = inlined_call_operand.hbm [shape: f32[2,768], index: 3, kind: output, shape index: {}]
  %s4 = sld [smem:[#allocation0]]
  $region30: #{tpu_custom_call.1} parent=0
    _
  %s6 = ssub.s32 1, %s4
  %s7 = scalar_select 0, %s6, %s4
  $region1: #{tpu_custom_call.1} parent=0
    #allocation2 [shape = 'u8[1024]{0}', space=vmem, size = 0x400, scoped, tag = 'input window, operand 0, single buffered']
    #allocation3 [shape = 's32[1]{0}', space=sflag, size = 0x4, scoped, tag = 'scoped memory for tpu_custom_call.1']
    #allocation4 [shape = 's32[1]{0}', space=sflag, size = 0x4, scoped, tag = 'scoped memory for tpu_custom_call.1']
    #allocation5 [shape = 'u8[393216]{0}', space=vmem, size = 0x60000, scoped, tag = 'input window, operand 1, single buffered']
    #allocation6 [shape = 's32[1]{0}', space=sflag, size = 0x4, scoped, tag = 'scoped memory for tpu_custom_call.1']
    #allocation7 [shape = 'u8[6144]{0}', space=vmem, size = 0x1800, scoped, tag = 'output window, operand 0, single buffered']
    %8 = vsyncpa [#allocation3], 0
    %9 = vsyncpa [#allocation6], 0
    %10 = vsyncpa [#allocation4], 0
    // Predicated region
    $region2: #{tpu_custom_call.1} parent=1 // pred_check
      _
    $region3: #{tpu_custom_call.1} parent=1 // pred_check_branch
      %12 = sbr.rel (0) target = $region5
    $region4: #{tpu_custom_call.1} parent=1 // pred_region
      %s14 = ssub.s32 32, 32
      %15 = vsyncadd [#allocation3], %s14
      %s17 = sshll.u32 [#allocation2], 4
      %s18 = int_to_ptr.vmem [resolvable:$true] %s17
      %20 = dma.hbm_to_vmem [thread:$0]  %s0, 32, %s18, [#allocation3]
    $region5: #{tpu_custom_call.1} parent=1 // pred_fallthru
      _
    // Predicated region
    $region6: #{tpu_custom_call.1} parent=1 // pred_check
      _
    $region7: #{tpu_custom_call.1} parent=1 // pred_check_branch
      %22 = sbr.rel (0) target = $region9
    $region8: #{tpu_custom_call.1} parent=1 // pred_region
      %s24 = ssub.s32 12288, 12288
      %25 = vsyncadd [#allocation6], %s24
      %s26 = sshll.u32 [#allocation5], 4
      %s27 = int_to_ptr.vmem [resolvable:$true] %s26
      %32 = dma.hbm_to_vmem [thread:$0]  %s1, 12288, %s27, [#allocation6], 768, 768, 48
    $region9: #{tpu_custom_call.1} parent=1 // pred_fallthru
      _
    // Predicated region
    $region10: #{tpu_custom_call.1} parent=1 // pred_check
      _
    $region11: #{tpu_custom_call.1} parent=1 // pred_check_branch
      %34 = sbr.rel (0) target = $region13
    $region12: #{tpu_custom_call.1} parent=1 // pred_region
      _
    $region13: #{tpu_custom_call.1} parent=1 // pred_fallthru
      _
    // Predicated region
    $region14: #{tpu_custom_call.1} parent=1 // pred_check
      _
    $region15: #{tpu_custom_call.1} parent=1 // pred_check_branch
      %36 = sbr.rel (0) target = $region17
    $region16: #{tpu_custom_call.1} parent=1 // pred_region
      %37 = dma.done [#allocation3], 32
    $region17: #{tpu_custom_call.1} parent=1 // pred_fallthru
      _
    // Predicated region
    $region18: #{tpu_custom_call.1} parent=1 // pred_check
      _
    $region19: #{tpu_custom_call.1} parent=1 // pred_check_branch
      %39 = sbr.rel (0) target = $region21
    $region20: #{tpu_custom_call.1} parent=1 // pred_region
      %40 = dma.done [#allocation6], 12288
    $region21: #{tpu_custom_call.1} parent=1 // pred_fallthru
      _
    %v41 = vld [vmem:[#allocation2] sm:$0x3]
    %v42 = vxor.u32 %v41, 2147483648
    %v43 = vmul.f32 %v42, 1.442695
    %v44 = vpow.pop %v43
    %v45 = vadd.f32 %v44, 1.0
    %v46 = vrcp.pop %v45
    %v47 = vmul.f32 1.0, %v46
    %v48 = vmul.f32 %v41, %v47
    %v49 = vld [vmem:[#allocation5] sm:$0xff]
    %v50 = vld [vmem:[#allocation5 + $0x8] sm:$0xff]
    %v51 = vld [vmem:[#allocation5 + $0x10] sm:$0xff]
    %v52 = vld [vmem:[#allocation5 + $0x18] sm:$0xff]
    %v53 = vld [vmem:[#allocation5 + $0x20] sm:$0xff]
    %v54 = vld [vmem:[#allocation5 + $0x28] sm:$0xff]
    %v55 = vld [vmem:[#allocation5 + $0x30] sm:$0xff]
    %v56 = vld [vmem:[#allocation5 + $0x38] sm:$0xff]
    %v57 = vld [vmem:[#allocation5 + $0x40] sm:$0xff]
    %v58 = vld [vmem:[#allocation5 + $0x48] sm:$0xff]
    %v59 = vld [vmem:[#allocation5 + $0x50] sm:$0xff]
    %v60 = vld [vmem:[#allocation5 + $0x58] sm:$0xff]
    %v61 = vld [vmem:[#allocation5 + $0x60] sm:$0xff]
    %v62 = vld [vmem:[#allocation5 + $0x68] sm:$0xff]
    %v63 = vld [vmem:[#allocation5 + $0x70] sm:$0xff]
    %v64 = vld [vmem:[#allocation5 + $0x78] sm:$0xff]
    %v65 = vld [vmem:[#allocation5 + $0x80] sm:$0xff]
    %v66 = vld [vmem:[#allocation5 + $0x88] sm:$0xff]
    %v67 = vld [vmem:[#allocation5 + $0x90] sm:$0xff]
    %v68 = vld [vmem:[#allocation5 + $0x98] sm:$0xff]
    %v69 = vld [vmem:[#allocation5 + $0xa0] sm:$0xff]
    %v70 = vld [vmem:[#allocation5 + $0xa8] sm:$0xff]
    %v71 = vld [vmem:[#allocation5 + $0xb0] sm:$0xff]
    %v72 = vld [vmem:[#allocation5 + $0xb8] sm:$0xff]
    %v73 = vld [vmem:[#allocation5 + $0xc0] sm:$0xff]
    %v74 = vld [vmem:[#allocation5 + $0xc8] sm:$0xff]
    %v75 = vld [vmem:[#allocation5 + $0xd0] sm:$0xff]
    %v76 = vld [vmem:[#allocation5 + $0xd8] sm:$0xff]
    %v77 = vld [vmem:[#allocation5 + $0xe0] sm:$0xff]
    %v78 = vld [vmem:[#allocation5 + $0xe8] sm:$0xff]
    %v79 = vld [vmem:[#allocation5 + $0xf0] sm:$0xff]
    %v80 = vld [vmem:[#allocation5 + $0xf8] sm:$0xff]
    %v81 = vld [vmem:[#allocation5 + $0x100] sm:$0xff]
    %v82 = vld [vmem:[#allocation5 + $0x108] sm:$0xff]
    %v83 = vld [vmem:[#allocation5 + $0x110] sm:$0xff]
    %v84 = vld [vmem:[#allocation5 + $0x118] sm:$0xff]
    %v85 = vld [vmem:[#allocation5 + $0x120] sm:$0xff]
    %v86 = vld [vmem:[#allocation5 + $0x128] sm:$0xff]
    %v87 = vld [vmem:[#allocation5 + $0x130] sm:$0xff]
    %v88 = vld [vmem:[#allocation5 + $0x138] sm:$0xff]
    %v89 = vld [vmem:[#allocation5 + $0x140] sm:$0xff]
    %v90 = vld [vmem:[#allocation5 + $0x148] sm:$0xff]
    %v91 = vld [vmem:[#allocation5 + $0x150] sm:$0xff]
    %v92 = vld [vmem:[#allocation5 + $0x158] sm:$0xff]
    %v93 = vld [vmem:[#allocation5 + $0x160] sm:$0xff]
    %v94 = vld [vmem:[#allocation5 + $0x168] sm:$0xff]
    %v95 = vld [vmem:[#allocation5 + $0x170] sm:$0xff]
    %v96 = vld [vmem:[#allocation5 + $0x178] sm:$0xff]
    %v97 = vld [vmem:[#allocation5 + $0x180] sm:$0xff]
    %v98 = vld [vmem:[#allocation5 + $0x188] sm:$0xff]
    %v99 = vld [vmem:[#allocation5 + $0x190] sm:$0xff]
    %v100 = vld [vmem:[#allocation5 + $0x198] sm:$0xff]
    %v101 = vld [vmem:[#allocation5 + $0x1a0] sm:$0xff]
    %v102 = vld [vmem:[#allocation5 + $0x1a8] sm:$0xff]
    %v103 = vld [vmem:[#allocation5 + $0x1b0] sm:$0xff]
    %v104 = vld [vmem:[#allocation5 + $0x1b8] sm:$0xff]
    %v105 = vld [vmem:[#allocation5 + $0x1c0] sm:$0xff]
    %v106 = vld [vmem:[#allocation5 + $0x1c8] sm:$0xff]
    %v107 = vld [vmem:[#allocation5 + $0x1d0] sm:$0xff]
    %v108 = vld [vmem:[#allocation5 + $0x1d8] sm:$0xff]
    %v109 = vld [vmem:[#allocation5 + $0x1e0] sm:$0xff]
    %v110 = vld [vmem:[#allocation5 + $0x1e8] sm:$0xff]
    %v111 = vld [vmem:[#allocation5 + $0x1f0] sm:$0xff]
    %v112 = vld [vmem:[#allocation5 + $0x1f8] sm:$0xff]
    %v113 = vld [vmem:[#allocation5 + $0x200] sm:$0xff]
    %v114 = vld [vmem:[#allocation5 + $0x208] sm:$0xff]
    %v115 = vld [vmem:[#allocation5 + $0x210] sm:$0xff]
    %v116 = vld [vmem:[#allocation5 + $0x218] sm:$0xff]
    %v117 = vld [vmem:[#allocation5 + $0x220] sm:$0xff]
    %v118 = vld [vmem:[#allocation5 + $0x228] sm:$0xff]
    %v119 = vld [vmem:[#allocation5 + $0x230] sm:$0xff]
    %v120 = vld [vmem:[#allocation5 + $0x238] sm:$0xff]
    %v121 = vld [vmem:[#allocation5 + $0x240] sm:$0xff]
    %v122 = vld [vmem:[#allocation5 + $0x248] sm:$0xff]
    %v123 = vld [vmem:[#allocation5 + $0x250] sm:$0xff]
    %v124 = vld [vmem:[#allocation5 + $0x258] sm:$0xff]
    %v125 = vld [vmem:[#allocation5 + $0x260] sm:$0xff]
    %v126 = vld [vmem:[#allocation5 + $0x268] sm:$0xff]
    %v127 = vld [vmem:[#allocation5 + $0x270] sm:$0xff]
    %v128 = vld [vmem:[#allocation5 + $0x278] sm:$0xff]
    %v129 = vld [vmem:[#allocation5 + $0x280] sm:$0xff]
    %v130 = vld [vmem:[#allocation5 + $0x288] sm:$0xff]
    %v131 = vld [vmem:[#allocation5 + $0x290] sm:$0xff]
    %v132 = vld [vmem:[#allocation5 + $0x298] sm:$0xff]
    %v133 = vld [vmem:[#allocation5 + $0x2a0] sm:$0xff]
    %v134 = vld [vmem:[#allocation5 + $0x2a8] sm:$0xff]
    %v135 = vld [vmem:[#allocation5 + $0x2b0] sm:$0xff]
    %v136 = vld [vmem:[#allocation5 + $0x2b8] sm:$0xff]
    %v137 = vld [vmem:[#allocation5 + $0x2c0] sm:$0xff]
    %v138 = vld [vmem:[#allocation5 + $0x2c8] sm:$0xff]
    %v139 = vld [vmem:[#allocation5 + $0x2d0] sm:$0xff]
    %v140 = vld [vmem:[#allocation5 + $0x2d8] sm:$0xff]
    %v141 = vld [vmem:[#allocation5 + $0x2e0] sm:$0xff]
    %v142 = vld [vmem:[#allocation5 + $0x2e8] sm:$0xff]
    %v143 = vld [vmem:[#allocation5 + $0x2f0] sm:$0xff]
    %v144 = vld [vmem:[#allocation5 + $0x2f8] sm:$0xff]
    %v145 = vld [vmem:[%s2] sm:$0x3f]
    %v147 = vlaneseq
    %v148 = vshrl.u32 %v147, 7
    %v149 = vsub.s32 0, %v148
    %v150 = vrot.slane %v145, %v149
    %v151 = vlaneseq
    %v152 = vshrl.u32 %v151, 7
    %v153 = vsub.s32 1, %v152
    %v154 = vrot.slane %v145, %v153
    %v155 = vlaneseq
    %v156 = vshrl.u32 %v155, 7
    %v157 = vsub.s32 2, %v156
    %v158 = vrot.slane %v145, %v157
    %v159 = vlaneseq
    %v160 = vshrl.u32 %v159, 7
    %v161 = vsub.s32 3, %v160
    %v162 = vrot.slane %v145, %v161
    %v163 = vlaneseq
    %v164 = vshrl.u32 %v163, 7
    %v165 = vsub.s32 4, %v164
    %v166 = vrot.slane %v145, %v165
    %v167 = vlaneseq
    %v168 = vshrl.u32 %v167, 7
    %v169 = vsub.s32 5, %v168
    %v170 = vrot.slane %v145, %v169
    %177 = vmatprep.subr.mxu0 %v50
    %178 = vmatpush1.msra.mxu0 %v49
    %179 = vmatprep.subr.mxu0 %v56
    %180 = vmatpush1.msra.mxu0 %v55
    %181 = vmatprep.subr.mxu0 %v62
    %182 = vmatpush1.msra.mxu0 %v61
    %183 = vmatprep.subr.mxu0 %v68
    %184 = vmatpush1.msra.mxu0 %v67
    %185 = vmatprep.subr.mxu0 %v74
    %186 = vmatpush1.msra.mxu0 %v73
    %187 = vmatprep.subr.mxu0 %v80
    %188 = vmatpush1.msra.mxu0 %v79
    %189 = vmatprep.subr.mxu0 %v86
    %190 = vmatpush1.msra.mxu0 %v85
    %191 = vmatprep.subr.mxu0 %v92
    %192 = vmatpush1.msra.mxu0 %v91
    %193 = vmatprep.subr.mxu0 %v98
    %194 = vmatpush1.msra.mxu0 %v97
    %195 = vmatprep.subr.mxu0 %v104
    %196 = vmatpush1.msra.mxu0 %v103
    %197 = vmatprep.subr.mxu0 %v110
    %198 = vmatpush1.msra.mxu0 %v109
    %199 = vmatprep.subr.mxu0 %v116
    %200 = vmatpush1.msra.mxu0 %v115
    %201 = vmatprep.subr.mxu0 %v122
    %202 = vmatpush1.msra.mxu0 %v121
    %203 = vmatprep.subr.mxu0 %v128
    %204 = vmatpush1.msra.mxu0 %v127
    %205 = vmatprep.subr.mxu0 %v134
    %206 = vmatpush1.msra.mxu0 %v133
    %207 = vmatprep.subr.mxu0 %v140
    %208 = vmatpush1.msra.mxu0 %v139
    %209 = vmatprep.subr.mxu0 0.0
    %210 = vmatpush1.msra.mxu0 0.0
    %211 = vmatprep.subr.mxu0 0.0
    %212 = vmatpush1.msra.mxu0 0.0
    %213 = vmatprep.subr.mxu0 0.0
    %214 = vmatpush1.msra.mxu0 0.0
    %215 = vmatprep.subr.mxu0 0.0
    %216 = vmatpush1.msra.mxu0 0.0
    %217 = vmatprep.subr.mxu0 0.0
    %218 = vmatpush1.msra.mxu0 0.0
    %219 = vmatprep.subr.mxu0 0.0
    %220 = vmatpush1.msra.mxu0 0.0
    %221 = vmatprep.subr.mxu0 0.0
    %222 = vmatpush1.msra.mxu0 0.0
    %223 = vmatprep.subr.mxu0 0.0
    %224 = vmatpush1.msra.mxu0 0.0
    %225 = vmatprep.subr.mxu0 0.0
    %226 = vmatpush1.msra.mxu0 0.0
    %227 = vmatprep.subr.mxu0 0.0
    %228 = vmatpush1.msra.mxu0 0.0
    %229 = vmatprep.subr.mxu0 0.0
    %230 = vmatpush1.msra.mxu0 0.0
    %231 = vmatprep.subr.mxu0 0.0
    %232 = vmatpush1.msra.mxu0 0.0
    %233 = vmatprep.subr.mxu0 0.0
    %234 = vmatpush1.msra.mxu0 0.0
    %235 = vmatprep.subr.mxu0 0.0
    %236 = vmatpush1.msra.mxu0 0.0
    %237 = vmatprep.subr.mxu0 0.0
    %238 = vmatpush1.msra.mxu0 0.0
    %239 = vmatprep.subr.mxu0 0.0
    %240 = vmatpush1.msra.mxu0 0.0
    %241 = vmatprep.mubr.f32.mxu0 0.0
    %242 = vmatmul.mubr.f32.gmra.mrb[0].mxu0 %v48
    %v243 = vpop.f32.mrb[0].mxu0
    %v244 = vadd.f32 %v150, %v243
    %v245 = vpop.f32.mrb[0].mxu0
    %v246 = vadd.f32 %v154, %v245
    %247 = vdwg.mxu0
    %248 = vmatprep.subr.mxu0 %v52
    %249 = vmatpush1.msra.mxu0 %v51
    %250 = vmatprep.subr.mxu0 %v58
    %251 = vmatpush1.msra.mxu0 %v57
    %252 = vmatprep.subr.mxu0 %v64
    %253 = vmatpush1.msra.mxu0 %v63
    %254 = vmatprep.subr.mxu0 %v70
    %255 = vmatpush1.msra.mxu0 %v69
    %256 = vmatprep.subr.mxu0 %v76
    %257 = vmatpush1.msra.mxu0 %v75
    %258 = vmatprep.subr.mxu0 %v82
    %259 = vmatpush1.msra.mxu0 %v81
    %260 = vmatprep.subr.mxu0 %v88
    %261 = vmatpush1.msra.mxu0 %v87
    %262 = vmatprep.subr.mxu0 %v94
    %263 = vmatpush1.msra.mxu0 %v93
    %264 = vmatprep.subr.mxu0 %v100
    %265 = vmatpush1.msra.mxu0 %v99
    %266 = vmatprep.subr.mxu0 %v106
    %267 = vmatpush1.msra.mxu0 %v105
    %268 = vmatprep.subr.mxu0 %v112
    %269 = vmatpush1.msra.mxu0 %v111
    %270 = vmatprep.subr.mxu0 %v118
    %271 = vmatpush1.msra.mxu0 %v117
    %272 = vmatprep.subr.mxu0 %v124
    %273 = vmatpush1.msra.mxu0 %v123
    %274 = vmatprep.subr.mxu0 %v130
    %275 = vmatpush1.msra.mxu0 %v129
    %276 = vmatprep.subr.mxu0 %v136
    %277 = vmatpush1.msra.mxu0 %v135
    %278 = vmatprep.subr.mxu0 %v142
    %279 = vmatpush1.msra.mxu0 %v141
    %280 = vmatprep.subr.mxu0 0.0
    %281 = vmatpush1.msra.mxu0 0.0
    %282 = vmatprep.subr.mxu0 0.0
    %283 = vmatpush1.msra.mxu0 0.0
    %284 = vmatprep.subr.mxu0 0.0
    %285 = vmatpush1.msra.mxu0 0.0
    %286 = vmatprep.subr.mxu0 0.0
    %287 = vmatpush1.msra.mxu0 0.0
    %288 = vmatprep.subr.mxu0 0.0
    %289 = vmatpush1.msra.mxu0 0.0
    %290 = vmatprep.subr.mxu0 0.0
    %291 = vmatpush1.msra.mxu0 0.0
    %292 = vmatprep.subr.mxu0 0.0
    %293 = vmatpush1.msra.mxu0 0.0
    %294 = vmatprep.subr.mxu0 0.0
    %295 = vmatpush1.msra.mxu0 0.0
    %296 = vmatprep.subr.mxu0 0.0
    %297 = vmatpush1.msra.mxu0 0.0
    %298 = vmatprep.subr.mxu0 0.0
    %299 = vmatpush1.msra.mxu0 0.0
    %300 = vmatprep.subr.mxu0 0.0
    %301 = vmatpush1.msra.mxu0 0.0
    %302 = vmatprep.subr.mxu0 0.0
    %303 = vmatpush1.msra.mxu0 0.0
    %304 = vmatprep.subr.mxu0 0.0
    %305 = vmatpush1.msra.mxu0 0.0
    %306 = vmatprep.subr.mxu0 0.0
    %307 = vmatpush1.msra.mxu0 0.0
    %308 = vmatprep.subr.mxu0 0.0
    %309 = vmatpush1.msra.mxu0 0.0
    %310 = vmatprep.subr.mxu0 0.0
    %311 = vmatpush1.msra.mxu0 0.0
    %312 = vmatprep.mubr.f32.mxu0 0.0
    %313 = vmatmul.mubr.f32.gmra.mrb[0].mxu0 %v48
    %v314 = vpop.f32.mrb[0].mxu0
    %v315 = vadd.f32 %v158, %v314
    %v316 = vpop.f32.mrb[0].mxu0
    %v317 = vadd.f32 %v162, %v316
    %318 = vdwg.mxu0
    %319 = vmatprep.subr.mxu0 %v54
    %320 = vmatpush1.msra.mxu0 %v53
    %321 = vmatprep.subr.mxu0 %v60
    %322 = vmatpush1.msra.mxu0 %v59
    %323 = vmatprep.subr.mxu0 %v66
    %324 = vmatpush1.msra.mxu0 %v65
    %325 = vmatprep.subr.mxu0 %v72
    %326 = vmatpush1.msra.mxu0 %v71
    %327 = vmatprep.subr.mxu0 %v78
    %328 = vmatpush1.msra.mxu0 %v77
    %329 = vmatprep.subr.mxu0 %v84
    %330 = vmatpush1.msra.mxu0 %v83
    %331 = vmatprep.subr.mxu0 %v90
    %332 = vmatpush1.msra.mxu0 %v89
    %333 = vmatprep.subr.mxu0 %v96
    %334 = vmatpush1.msra.mxu0 %v95
    %335 = vmatprep.subr.mxu0 %v102
    %336 = vmatpush1.msra.mxu0 %v101
    %337 = vmatprep.subr.mxu0 %v108
    %338 = vmatpush1.msra.mxu0 %v107
    %339 = vmatprep.subr.mxu0 %v114
    %340 = vmatpush1.msra.mxu0 %v113
    %341 = vmatprep.subr.mxu0 %v120
    %342 = vmatpush1.msra.mxu0 %v119
    %343 = vmatprep.subr.mxu0 %v126
    %344 = vmatpush1.msra.mxu0 %v125
    %345 = vmatprep.subr.mxu0 %v132
    %346 = vmatpush1.msra.mxu0 %v131
    %347 = vmatprep.subr.mxu0 %v138
    %348 = vmatpush1.msra.mxu0 %v137
    %349 = vmatprep.subr.mxu0 %v144
    %350 = vmatpush1.msra.mxu0 %v143
    %351 = vmatprep.subr.mxu0 0.0
    %352 = vmatpush1.msra.mxu0 0.0
    %353 = vmatprep.subr.mxu0 0.0
    %354 = vmatpush1.msra.mxu0 0.0
    %355 = vmatprep.subr.mxu0 0.0
    %356 = vmatpush1.msra.mxu0 0.0
    %357 = vmatprep.subr.mxu0 0.0
    %358 = vmatpush1.msra.mxu0 0.0
    %359 = vmatprep.subr.mxu0 0.0
    %360 = vmatpush1.msra.mxu0 0.0
    %361 = vmatprep.subr.mxu0 0.0
    %362 = vmatpush1.msra.mxu0 0.0
    %363 = vmatprep.subr.mxu0 0.0
    %364 = vmatpush1.msra.mxu0 0.0
    %365 = vmatprep.subr.mxu0 0.0
    %366 = vmatpush1.msra.mxu0 0.0
    %367 = vmatprep.subr.mxu0 0.0
    %368 = vmatpush1.msra.mxu0 0.0
    %369 = vmatprep.subr.mxu0 0.0
    %370 = vmatpush1.msra.mxu0 0.0
    %371 = vmatprep.subr.mxu0 0.0
    %372 = vmatpush1.msra.mxu0 0.0
    %373 = vmatprep.subr.mxu0 0.0
    %374 = vmatpush1.msra.mxu0 0.0
    %375 = vmatprep.subr.mxu0 0.0
    %376 = vmatpush1.msra.mxu0 0.0
    %377 = vmatprep.subr.mxu0 0.0
    %378 = vmatpush1.msra.mxu0 0.0
    %379 = vmatprep.subr.mxu0 0.0
    %380 = vmatpush1.msra.mxu0 0.0
    %381 = vmatprep.subr.mxu0 0.0
    %382 = vmatpush1.msra.mxu0 0.0
    %383 = vmatprep.mubr.f32.mxu0 0.0
    %384 = vmatmul.mubr.f32.gmra.mrb[0].mxu0 %v48
    %v385 = vpop.f32.mrb[0].mxu0
    %v386 = vadd.f32 %v166, %v385
    %v387 = vpop.f32.mrb[0].mxu0
    %v388 = vadd.f32 %v170, %v387
    %389 = vdwg.mxu0
    %v396 = vcombine.low %v244, %v246
    %v397 = vcombine.low %v315, %v317
    %v399 = vunpack.c.l.s4 1983009808
    %v400 = vunpack.c.0.s8 %v399
    %v401 = vlaneseq
    %v402 = vshrl.u32 %v401, 7
    %v403 = vsub.s32 %v400, %v402
    %v404 = vrot.slane %v396, %v403
    %v406 = vunpack.c.l.s4 1983009808
    %v407 = vunpack.c.0.s8 %v406
    %v408 = vlaneseq
    %v409 = vshrl.u32 %v408, 7
    %v410 = vsub.s32 %v407, %v409
    %v411 = vrot.slane %v397, %v410
    %v412 = vcombine.low %v404, %v411
    %v413 = vcombine.low %v386, %v388
    %v415 = vunpack.c.l.s4 1983009808
    %v416 = vunpack.c.0.s8 %v415
    %v417 = vlaneseq
    %v418 = vshrl.u32 %v417, 7
    %v419 = vsub.s32 %v416, %v418
    %v420 = vrot.slane %v413, %v419
    %423 = vst [vmem:[#allocation7] sm:$0xff] %v412
    %424 = vst [vmem:[#allocation7 + $0x8] sm:$0xf] %v420
    // Predicated region
    $region22: #{tpu_custom_call.1} parent=1 // pred_check
      _
    $region23: #{tpu_custom_call.1} parent=1 // pred_check_branch
      %426 = sbr.rel (0) target = $region25
    $region24: #{tpu_custom_call.1} parent=1 // pred_region
      %s428 = ssub.s32 192, 192
      %429 = vsyncadd [#allocation4], %s428
      %s431 = sshll.u32 [#allocation7], 4
      %s432 = int_to_ptr.vmem [resolvable:$true] %s431
      %434 = dma.vmem_to_hbm [thread:$0]  %s432, 192, %s3, [#allocation4]
    $region25: #{tpu_custom_call.1} parent=1 // pred_fallthru
      _
    // Predicated region
    $region26: #{tpu_custom_call.1} parent=1 // pred_check
      _
    $region27: #{tpu_custom_call.1} parent=1 // pred_check_branch
      %436 = sbr.rel (0) target = $region29
    $region28: #{tpu_custom_call.1} parent=1 // pred_region
      %437 = dma.done [#allocation4], 192
    $region29: #{tpu_custom_call.1} parent=1 // pred_fallthru
      _
    %438 = vsyncpa [#allocation3], 1
    %439 = vsyncpa [#allocation6], 1
    %440 = vsyncpa [#allocation4], 1

</llo_original>
